<compile_context>
chip_gen: v6e
topology: v6e:2x2x1
jax: 0.10.0
libtpu: 0.0.40
codegen_flags: <defaults>
</compile_context>

<pallas_src>
import functools

import jax
import jax.numpy as jnp
from jax.experimental import pallas as pl
from jax.experimental.pallas import tpu as pltpu

_LANE = 128
_SUBLANE = 8
_TILE_BUDGET = 2 * 1024 * 1024    # target bytes per (TB, TN) data tile
_TILE_HARD_CAP = 3 * 1024 * 1024  # max bytes for an unsplittable full-row tile


def _round_up(a, m):
    return -(-a // m) * m


def _intensity_kernel(r_ref, x_ref, o_ref, *, scale):
    # r_ref: (TB, 1) f32 standard-normal samples for this batch tile.
    # Compute noise = 1 + scale * clip(r, -2, 2) in f32 (matches torch, which
    # clamps in f32), cast once to x's dtype, broadcast-multiply on the VPU.
    noise = 1.0 + scale * jnp.clip(r_ref[...], -2.0, 2.0)
    o_ref[...] = x_ref[...] * noise.astype(x_ref.dtype)


def _pick_batch_tile(B, row_tile_bytes):
    """Largest batch tile (multiple of 8, or full B when B <= 8) within budget."""
    if B <= _SUBLANE:
        return B
    cap = _round_up(B, _SUBLANE)
    fit = (_TILE_BUDGET // max(row_tile_bytes, 1)) // _SUBLANE * _SUBLANE
    return max(_SUBLANE, min(cap, fit))


def _launch(r2d, x2d, scale, TB, TN, grid):
    B, N = x2d.shape
    return pl.pallas_call(
        functools.partial(_intensity_kernel, scale=float(scale)),
        out_shape=jax.ShapeDtypeStruct((B, N), x2d.dtype),
        grid=grid,
        in_specs=[
            # Per-batch r column: same block for every lane step j, so the
            # pipeline only re-fetches it when the batch index i changes.
            pl.BlockSpec((TB, 1), lambda i, j: (i, 0)),
            # Lane-dense data tile.
            pl.BlockSpec((TB, TN), lambda i, j: (i, j)),
        ],
        out_specs=pl.BlockSpec((TB, TN), lambda i, j: (i, j)),
        compiler_params=pltpu.CompilerParams(
            dimension_semantics=("parallel", "parallel")),
    )(r2d, x2d)


def intensity(x, r, scale):
    """out = x * (1 + scale * clip(r, -2, 2)), per-batch broadcast.

    x: (B, C, H, W); r: (B,) standard-normal samples; scale: python float.
    """
    B, C, H, W = x.shape
    N = C * H * W
    dtype = x.dtype
    itemsize = jnp.dtype(dtype).itemsize

    x2d = x.reshape(B, N)                       # free for contiguous NCHW
    r2d = r.reshape(B, 1).astype(jnp.float32)

    min_tb = B if B <= _SUBLANE else _SUBLANE
    pad_n = 0
    if N % _LANE != 0 and min_tb * N * itemsize > _TILE_HARD_CAP:
        # Rare fallback: ragged row too large for one full-width tile.
        pad_n = _round_up(N, _LANE) - N
        x2d = jnp.pad(x2d, ((0, 0), (0, pad_n)))
    Np = N + pad_n

    if Np % _LANE == 0:
        # Lane-tileable: stripe the row into large multiples of 128.
        tn_max = max(_LANE, (_TILE_BUDGET // (min_tb * itemsize)) // _LANE * _LANE)
        TN = min(Np, tn_max)
    else:
        # Full-extent last dim (exempt from the 128 rule): no pad/slice pass,
        # only the last partial vreg per row is a masked store.
        TN = Np

    TB = _pick_batch_tile(B, TN * itemsize)
    grid = (pl.cdiv(B, TB), pl.cdiv(Np, TN))

    out = _launch(r2d, x2d, scale, TB, TN, grid)
    if pad_n:
        out = out[:, :N]
    return out.reshape(B, C, H, W)


if __name__ == "__main__":
    key = jax.random.PRNGKey(0)
    kx, kr, kx2, kr2 = jax.random.split(key, 4)

    scale = 0.5

    # Small shape consistent with the module's (B, C, H, W) input.
    B, C, H, W = 2, 4, 16, 16
    x = jax.random.normal(kx, (B, C, H, W), dtype=jnp.float32)
    # Equivalent of torch.randn((B, 1, 1, 1)): one normal sample per batch.
    r = jax.random.normal(kr, (B,), dtype=jnp.float32)

    out = jax.block_until_ready(intensity(x, r, scale))
    ref = x * (1.0 + scale * jnp.clip(r, -2.0, 2.0)).reshape(B, 1, 1, 1)
    assert out.shape == x.shape and out.dtype == x.dtype
    assert jnp.allclose(out, ref, atol=1e-6, rtol=1e-6)

    # Ragged shape: exercises full-extent lane blocks + partial batch blocks.
    B2, C2, H2, W2 = 10, 3, 20, 21
    x2 = jax.random.normal(kx2, (B2, C2, H2, W2), dtype=jnp.float32)
    r2 = jax.random.normal(kr2, (B2,), dtype=jnp.float32)
    out2 = jax.block_until_ready(intensity(x2, r2, scale))
    ref2 = x2 * (1.0 + scale * jnp.clip(r2, -2.0, 2.0)).reshape(B2, 1, 1, 1)
    assert jnp.allclose(out2, ref2, atol=1e-6, rtol=1e-6)

    print("KERNEL_OK")
</pallas_src>

<mosaic_0001>
module attributes {stable_mosaic.version = 11 : i64} {
  func.func @_intensity_kernel(%arg0: i32, %arg1: i32, %arg2: memref<2x1xf32, #tpu.memory_space<vmem>>, %arg3: memref<2x1024xf32, #tpu.memory_space<vmem>>, %arg4: memref<2x1024xf32, #tpu.memory_space<vmem>>) attributes {dimension_semantics = [#tpu.dimension_semantics<parallel>, #tpu.dimension_semantics<parallel>], iteration_bounds = array<i64: 1, 1>, scalar_prefetch = 0 : i64, scratch_operands = 0 : i64, tpu.core_type = #tpu.core_type<tc>, window_params = [{transform_indices = @transform_0, window_bounds = array<i64: 2, 1>}, {transform_indices = @transform_1, window_bounds = array<i64: 2, 1024>}, {transform_indices = @transform_2, window_bounds = array<i64: 2, 1024>}]} {
    %c0 = arith.constant 0 : index
    %c0_0 = arith.constant 0 : index
    %0 = vector.load %arg2[%c0, %c0_0] : memref<2x1xf32, #tpu.memory_space<vmem>>, vector<2x1xf32>
    %cst = arith.constant -2.000000e+00 : f32
    %cst_1 = arith.constant 2.000000e+00 : f32
    %1 = vector.broadcast %cst : f32 to vector<2x1xf32>
    %2 = arith.maximumf %1, %0 : vector<2x1xf32>
    %3 = vector.broadcast %cst_1 : f32 to vector<2x1xf32>
    %4 = arith.minimumf %3, %2 : vector<2x1xf32>
    %cst_2 = arith.constant 5.000000e-01 : f32
    %5 = vector.broadcast %cst_2 : f32 to vector<2x1xf32>
    %6 = arith.mulf %5, %4 : vector<2x1xf32>
    %cst_3 = arith.constant 1.000000e+00 : f32
    %7 = vector.broadcast %cst_3 : f32 to vector<2x1xf32>
    %8 = arith.addf %7, %6 : vector<2x1xf32>
    %c0_4 = arith.constant 0 : index
    %c0_5 = arith.constant 0 : index
    %9 = vector.load %arg3[%c0_4, %c0_5] : memref<2x1024xf32, #tpu.memory_space<vmem>>, vector<2x1024xf32>
    %10 = vector.broadcast %8 : vector<2x1xf32> to vector<2x1024xf32>
    %11 = arith.mulf %9, %10 : vector<2x1024xf32>
    %c0_6 = arith.constant 0 : index
    %c0_7 = arith.constant 0 : index
    %12 = vector.load %arg4[%c0_6, %c0_7] : memref<2x1024xf32, #tpu.memory_space<vmem>>, vector<2x1024xf32>
    tpu.vector_store %arg4[%c0_6, %c0_7], %11 {strides = array<i32>} : memref<2x1024xf32, #tpu.memory_space<vmem>>, vector<2x1024xf32>,
    return
  }
  func.func @transform_0(%arg0: i32, %arg1: i32) -> (i32, i32) {
    %c0_i32 = arith.constant 0 : i32
    %c0_i32_0 = arith.constant 0 : i32
    return %arg0, %c0_i32 : i32, i32
  }
  func.func @transform_1(%arg0: i32, %arg1: i32) -> (i32, i32) {
    %c0_i32 = arith.constant 0 : i32
    return %arg0, %arg1 : i32, i32
  }
  func.func @transform_2(%arg0: i32, %arg1: i32) -> (i32, i32) {
    %c0_i32 = arith.constant 0 : i32
    return %arg0, %arg1 : i32, i32
  }
}

</mosaic_0001>

<llo_original>
// kernel: tpu_custom_call.1
$region0: #{tpu_custom_call.1}
  #allocation0 [shape = 'u32[]', space=smem, size = 0x4, offset = 0x4, fixed_abs, tag = 'smem constant byte address 0x4 - core index']
  #allocation1 [shape = 'u32[144,128]{1,0:T(1,128)}', space=vmem, size = 0x12000, scoped, tag = 'internal scratch']
  %s0 = inlined_call_operand.vmem [shape: f32[2,1], index: 0, kind: input, shape index: {}]
  %s1 = inlined_call_operand.hbm [shape: f32[2,1024], index: 1, kind: input, shape index: {}]
  %s2 = inlined_call_operand.hbm [shape: f32[2,1024], index: 2, kind: output, shape index: {}]
  %s3 = sld [smem:[#allocation0]]
  $region22: #{tpu_custom_call.1} parent=0
    _
  %s5 = ssub.s32 1, %s3
  %s6 = scalar_select 0, %s5, %s3
  $region1: #{tpu_custom_call.1} parent=0
    #allocation2 [shape = 'u8[8192]{0}', space=vmem, size = 0x2000, scoped, tag = 'input window, operand 1, single buffered']
    #allocation3 [shape = 's32[1]{0}', space=sflag, size = 0x4, scoped, tag = 'scoped memory for tpu_custom_call.1']
    #allocation4 [shape = 's32[1]{0}', space=sflag, size = 0x4, scoped, tag = 'scoped memory for tpu_custom_call.1']
    #allocation5 [shape = 'u8[8192]{0}', space=vmem, size = 0x2000, scoped, tag = 'output window, operand 0, single buffered']
    %7 = vsyncpa [#allocation3], 0
    %8 = vsyncpa [#allocation4], 0
    // Predicated region
    $region2: #{tpu_custom_call.1} parent=1 // pred_check
      _
    $region3: #{tpu_custom_call.1} parent=1 // pred_check_branch
      %10 = sbr.rel (0) target = $region5
    $region4: #{tpu_custom_call.1} parent=1 // pred_region
      _
    $region5: #{tpu_custom_call.1} parent=1 // pred_fallthru
      _
    // Predicated region
    $region6: #{tpu_custom_call.1} parent=1 // pred_check
      _
    $region7: #{tpu_custom_call.1} parent=1 // pred_check_branch
      %12 = sbr.rel (0) target = $region9
    $region8: #{tpu_custom_call.1} parent=1 // pred_region
      %s14 = ssub.s32 256, 256
      %15 = vsyncadd [#allocation3], %s14
      %s17 = sshll.u32 [#allocation2], 4
      %s18 = int_to_ptr.vmem [resolvable:$true] %s17
      %20 = dma.hbm_to_vmem [thread:$0]  %s1, 256, %s18, [#allocation3]
    $region9: #{tpu_custom_call.1} parent=1 // pred_fallthru
      _
    // Predicated region
    $region10: #{tpu_custom_call.1} parent=1 // pred_check
      _
    $region11: #{tpu_custom_call.1} parent=1 // pred_check_branch
      %22 = sbr.rel (0) target = $region13
    $region12: #{tpu_custom_call.1} parent=1 // pred_region
      %23 = dma.done [#allocation3], 256
    $region13: #{tpu_custom_call.1} parent=1 // pred_fallthru
      _
    %v24 = vld [vmem:[%s0] sm:$0x3]
    %v25 = vmax.f32 %v24, -2.0
    %v26 = vmin.f32 %v25, 2.0
    %v27 = vmul.f32 %v26, 0.5
    %v28 = vadd.f32 %v27, 1.0
    %v29 = vld [vmem:[#allocation2] sm:$0xff]
    %v30 = vld [vmem:[#allocation2 + $0x8] sm:$0xff]
    %32 = vset.pattern.permute.xlu0 0
    %33 = vperm.xlu0 %32, %v28
    %v34 = vpop.permute.xlu0 %33
    %v36 = vunpack.c.l.s4 269488144
    %v37 = vunpack.c.0.s8 %v36
    %v38 = vlaneseq
    %v39 = vshrl.u32 %v38, 7
    %v40 = vsub.s32 %v37, %v39
    %v41 = vrot.slane %v34, %v40
    %v43 = vmul.f32 %v29, %v41
    %v44 = vmul.f32 %v30, %v41
    %45 = vst [vmem:[#allocation5] sm:$0xff] %v43
    %46 = vst [vmem:[#allocation5 + $0x8] sm:$0xff] %v44
    // Predicated region
    $region14: #{tpu_custom_call.1} parent=1 // pred_check
      _
    $region15: #{tpu_custom_call.1} parent=1 // pred_check_branch
      %48 = sbr.rel (0) target = $region17
    $region16: #{tpu_custom_call.1} parent=1 // pred_region
      %s50 = ssub.s32 256, 256
      %51 = vsyncadd [#allocation4], %s50
      %s53 = sshll.u32 [#allocation5], 4
      %s54 = int_to_ptr.vmem [resolvable:$true] %s53
      %56 = dma.vmem_to_hbm [thread:$0]  %s54, 256, %s2, [#allocation4]
    $region17: #{tpu_custom_call.1} parent=1 // pred_fallthru
      _
    // Predicated region
    $region18: #{tpu_custom_call.1} parent=1 // pred_check
      _
    $region19: #{tpu_custom_call.1} parent=1 // pred_check_branch
      %58 = sbr.rel (0) target = $region21
    $region20: #{tpu_custom_call.1} parent=1 // pred_region
      %59 = dma.done [#allocation4], 256
    $region21: #{tpu_custom_call.1} parent=1 // pred_fallthru
      _
    %60 = vsyncpa [#allocation3], 1
    %61 = vsyncpa [#allocation4], 1

</llo_original>
